<compile_context>
chip_gen: v7x
topology: tpu7x:2x2x1
jax: 0.10.0
libtpu: 0.0.40
codegen_flags: <defaults>
</compile_context>

<pallas_src>
import jax
import jax.numpy as jnp
from jax.experimental import pallas as pl
from jax.experimental.pallas import tpu as pltpu


_LANE_TILE_MAX = 8192             # max lane-dim tile (multiple of 128)
_MIN_PALLAS_ELEMENTS = 1 << 18    # below this, fused XLA jnp.max beats kernel launch


def _round_up(a, b):
    return -(-a // b) * b


def _generation_params():
    """Returns (target_real_block_bytes, vmem_sizing_budget, vmem_limit_cap, multi_tc)."""
    vmem = 128 << 20
    try:
        info = pltpu.get_tpu_info()
        vmem = int(getattr(info, "vmem_capacity_bytes", vmem) or vmem)
    except Exception:
        pass
    if vmem <= (80 << 20):
        # v7x-class: ~3.2 TB/s HBM per TC, 64 MiB VMEM per TC, 2 TCs/chip.
        return 6 << 20, 44 << 20, 48 << 20, True
    # v5e/v6e-class: 128 MiB VMEM, single TensorCore.
    return 4 << 20, 60 << 20, 96 << 20, False


def _maxpool_channel_kernel(x_ref, o_ref):
    # x_ref: (g_tile, poolsize, thw_tile) ; o_ref: (g_tile, thw_tile)
    # Max over the small poolsize axis (sublane direction). The XLU reduce over a
    # few (possibly padded) sublanes is far from binding; HBM BW is the roofline.
    o_ref[...] = jnp.max(x_ref[...], axis=1)


def _choose_plan(G, poolsize, THW, itemsize):
    target_real, vmem_budget, vmem_cap, multi_tc = _generation_params()

    # Sublane packing of the poolsize axis in VMEM: 8 (f32), 16 (bf16), 32 (i8).
    sub = max(8, 32 // itemsize)
    mid_padded = _round_up(poolsize, sub)

    # Lane tiling: full THW when moderate, else near-equal lane-dense tiles.
    if THW <= _LANE_TILE_MAX:
        thw_tile = THW
    else:
        thw_tile = _round_up(pl.cdiv(THW, pl.cdiv(THW, _LANE_TILE_MAX)), 128)

    # Safety: if even the minimal legal block (sub group rows) would blow the
    # VMEM budget (pathological poolsize*THW), shrink the lane tile.
    while (thw_tile > 512 and
           2 * sub * (mid_padded + 1) * _round_up(thw_tile, 128) * itemsize > vmem_budget):
        thw_tile = _round_up(pl.cdiv(thw_tile, 2), 128)
    lane_padded = _round_up(thw_tile, 128)

    # Size g_tile from REAL (unpadded) HBM bytes per group row ...
    in_row_real = poolsize * thw_tile * itemsize
    # ... and separately bound the sublane-padded VMEM footprint (double-buffered
    # input + output blocks) by the generation-aware budget.
    in_row_vmem = mid_padded * lane_padded * itemsize
    out_row_vmem = lane_padded * itemsize
    g_by_target = max(1, target_real // in_row_real)
    g_by_vmem = max(1, vmem_budget // (2 * (in_row_vmem + out_row_vmem)))

    g_tile = min(g_by_target, g_by_vmem, G)
    if g_tile < G:
        g_tile = max(sub, (g_tile // sub) * sub)   # keep output sublane dim legal
        if g_tile >= G:
            g_tile = G

    # Megacore balance (2-TC chips only): for small grids, make the number of
    # parallel steps even so both TensorCores get an equal share.
    if multi_tc:
        t_tiles = pl.cdiv(THW, thw_tile)
        g_tiles = pl.cdiv(G, g_tile)
        total = g_tiles * t_tiles
        if total < 8 and total % 2 == 1 and G > sub:
            for extra in (1, 2, 3):
                cand = min(G, max(sub, _round_up(pl.cdiv(G, g_tiles + extra), sub)))
                if (pl.cdiv(G, cand) * t_tiles) % 2 == 0:
                    g_tile = cand   # cand <= g_tile, so the VMEM bound still holds
                    break

    return g_tile, thw_tile, lane_padded, mid_padded, sub, vmem_cap


def max_pool_channel(x: jax.Array, poolsize: int, *,
                     min_pallas_elements: int = _MIN_PALLAS_ELEMENTS,
                     group_tile: int | None = None) -> jax.Array:
    """x: (B, C, T, H, W) -> (B, C // poolsize, T, H, W), max over channel windows."""
    B, C, T, H, W = x.shape
    C_out = C // poolsize          # PyTorch MaxPool3d (stride==kernel) truncates leftovers
    if C_out == 0:
        return jnp.zeros((B, 0, T, H, W), dtype=x.dtype)
    x = x[:, : C_out * poolsize]   # no-op when poolsize divides C
    THW = T * H * W

    # Tiny problems: kernel launch + pipeline warmup dominates -> let XLA fuse it.
    if x.size < min_pallas_elements:
        return jnp.max(x.reshape(B, C_out, poolsize, T, H, W), axis=2)

    G = B * C_out
    itemsize = jnp.dtype(x.dtype).itemsize
    g_tile, thw_tile, lane_padded, mid_padded, sub, vmem_cap = _choose_plan(
        G, poolsize, THW, itemsize)
    if group_tile is not None:     # testing hook: force a specific group tile
        g_tile = min(int(group_tile), G)

    # Scoped-VMEM limit: double-buffered (sublane-padded) input + output blocks
    # plus slack, clamped to the generation cap (48 MiB v7x-class, 96 MiB otherwise).
    in_block_vmem = g_tile * mid_padded * lane_padded * itemsize
    out_block_vmem = _round_up(g_tile, sub) * lane_padded * itemsize
    vmem_limit = int(min(max(2 * (in_block_vmem + out_block_vmem) + (2 << 20),
                             16 << 20), vmem_cap))

    # Free contiguous view: group channel windows, flatten T/H/W into the lane axis.
    x_g = x.reshape(G, poolsize, THW)
    grid = (pl.cdiv(G, g_tile), pl.cdiv(THW, thw_tile))

    out2d = pl.pallas_call(
        _maxpool_channel_kernel,
        out_shape=jax.ShapeDtypeStruct((G, THW), x.dtype),
        grid_spec=pl.GridSpec(
            grid=grid,
            in_specs=[pl.BlockSpec((g_tile, poolsize, thw_tile),
                                   lambda i, j: (i, 0, j))],
            out_specs=pl.BlockSpec((g_tile, thw_tile), lambda i, j: (i, j)),
        ),
        compiler_params=pltpu.CompilerParams(
            dimension_semantics=("parallel", "parallel"),
            vmem_limit_bytes=vmem_limit,
        ),
        cost_estimate=pl.CostEstimate(
            flops=int(G) * int(poolsize) * int(THW),
            transcendentals=0,
            bytes_accessed=int(G) * (int(poolsize) + 1) * int(THW) * int(itemsize),
        ),
    )(x_g)

    return out2d.reshape(B, C_out, T, H, W)


def _reference(x: jax.Array, poolsize: int) -> jax.Array:
    B, C, T, H, W = x.shape
    C_out = C // poolsize
    x = x[:, : C_out * poolsize]
    return jnp.max(x.reshape(B, C_out, poolsize, T, H, W), axis=2)


if __name__ == "__main__":
    key = jax.random.PRNGKey(0)
    k1, k2, k3, k4, k5, k6 = jax.random.split(key, 6)

    # 1) f32 Pallas path, shaped like the module's (BN, C, T, H, W) use-case.
    x1 = jax.random.normal(k1, (2, 64, 8, 7, 7), dtype=jnp.float32)
    y1 = jax.block_until_ready(max_pool_channel(x1, 4, min_pallas_elements=0))
    assert y1.shape == (2, 16, 8, 7, 7)
    assert jnp.array_equal(y1, _reference(x1, 4))

    # 2) f32, ragged group tail (G=20 with forced g_tile=16) + THW=147 (not /128).
    x2 = jax.random.normal(k2, (5, 16, 3, 7, 7), dtype=jnp.float32)
    y2 = jax.block_until_ready(
        max_pool_channel(x2, 4, min_pallas_elements=0, group_tile=16))
    assert y2.shape == (5, 4, 3, 7, 7)
    assert jnp.array_equal(y2, _reference(x2, 4))

    # 3) bf16, poolsize=2 (heavily sublane-padded reduce path).
    x3 = jax.random.normal(k3, (2, 32, 4, 9, 9), dtype=jnp.bfloat16)
    y3 = jax.block_until_ready(max_pool_channel(x3, 2, min_pallas_elements=0))
    assert y3.shape == (2, 16, 4, 9, 9)
    assert jnp.array_equal(y3, _reference(x3, 2))

    # 4) int8 (32-wide sublane packing).
    x4 = jax.random.randint(k4, (2, 16, 2, 8, 8), -100, 100,
                            dtype=jnp.int32).astype(jnp.int8)
    y4 = jax.block_until_ready(max_pool_channel(x4, 4, min_pallas_elements=0))
    assert y4.shape == (2, 4, 2, 8, 8)
    assert jnp.array_equal(y4, _reference(x4, 4))

    # 5) THW > 8192: balanced lane tiling (two near-equal 4608-wide lane tiles).
    x5 = jax.random.normal(k5, (1, 8, 1, 96, 96), dtype=jnp.float32)
    y5 = jax.block_until_ready(max_pool_channel(x5, 2, min_pallas_elements=0))
    assert y5.shape == (1, 4, 1, 96, 96)
    assert jnp.array_equal(y5, _reference(x5, 2))

    # 6) Tiny input + channel truncation (C % poolsize != 0): fused-XLA fallback.
    x6 = jax.random.normal(k6, (2, 10, 2, 3, 3), dtype=jnp.float32)
    y6 = jax.block_until_ready(max_pool_channel(x6, 4))
    assert y6.shape == (2, 2, 2, 3, 3)
    assert jnp.array_equal(y6, _reference(x6, 4))

    print("KERNEL_OK")
</pallas_src>

<mosaic_0001>
module attributes {stable_mosaic.version = 11 : i64} {
  func.func @_maxpool_channel_kernel(%arg0: i32, %arg1: i32, %arg2: memref<32x4x392xf32, #tpu.memory_space<vmem>>, %arg3: memref<32x392xf32, #tpu.memory_space<vmem>>) attributes {dimension_semantics = [#tpu.dimension_semantics<parallel>, #tpu.dimension_semantics<parallel>], iteration_bounds = array<i64: 1, 1>, scalar_prefetch = 0 : i64, scratch_operands = 0 : i64, tpu.core_type = #tpu.core_type<tc>, window_params = [{transform_indices = @transform_0, window_bounds = array<i64: 32, 4, 392>}, {transform_indices = @transform_1, window_bounds = array<i64: 32, 392>}]} {
    %c0 = arith.constant 0 : index
    %c0_0 = arith.constant 0 : index
    %c0_1 = arith.constant 0 : index
    %0 = vector.load %arg2[%c0, %c0_0, %c0_1] : memref<32x4x392xf32, #tpu.memory_space<vmem>>, vector<32x4x392xf32>
    %cst = arith.constant dense<0xFF800000> : vector<32x392xf32>
    %1 = vector.multi_reduction <maximumf>, %0, %cst [1] : vector<32x4x392xf32> to vector<32x392xf32>
    %c0_2 = arith.constant 0 : index
    %c0_3 = arith.constant 0 : index
    %2 = vector.load %arg3[%c0_2, %c0_3] : memref<32x392xf32, #tpu.memory_space<vmem>>, vector<32x392xf32>
    tpu.vector_store %arg3[%c0_2, %c0_3], %1 {strides = array<i32>} : memref<32x392xf32, #tpu.memory_space<vmem>>, vector<32x392xf32>,
    return
  }
  func.func @transform_0(%arg0: i32, %arg1: i32) -> (i32, i32, i32) {
    %c0_i32 = arith.constant 0 : i32
    %c0_i32_0 = arith.constant 0 : i32
    return %arg0, %c0_i32, %arg1 : i32, i32, i32
  }
  func.func @transform_1(%arg0: i32, %arg1: i32) -> (i32, i32) {
    %c0_i32 = arith.constant 0 : i32
    return %arg0, %arg1 : i32, i32
  }
}

</mosaic_0001>

<llo_original>
// kernel: tpu_custom_call.1
$region0: #{tpu_custom_call.1}
  #allocation0 [shape = 'u32[]', space=smem, size = 0x4, offset = 0x4, fixed_abs, tag = 'smem constant byte address 0x4 - core index']
  #allocation1 [shape = 'u32[144,128]{1,0:T(1,128)}', space=vmem, size = 0x12000, scoped, tag = 'internal scratch']
  %s0 = inlined_call_operand.hbm [shape: f32[32,4,392], index: 0, kind: input, shape index: {}]
  %s1 = inlined_call_operand.hbm [shape: f32[32,392], index: 1, kind: output, shape index: {}]
  %s2 = sld [smem:[#allocation0]]
  $region18: #{tpu_custom_call.1} parent=0
    _
  %s4 = ssub.s32 1, %s2
  %s5 = scalar_select 0, %s4, %s2
  $region1: #{tpu_custom_call.1} parent=0
    #allocation2 [shape = 'u8[262144]{0}', space=vmem, size = 0x40000, scoped, tag = 'input window, operand 0, single buffered']
    #allocation3 [shape = 's32[1]{0}', space=sflag, size = 0x4, scoped, tag = 'scoped memory for tpu_custom_call.1']
    #allocation4 [shape = 's32[1]{0}', space=sflag, size = 0x4, scoped, tag = 'scoped memory for tpu_custom_call.1']
    #allocation5 [shape = 'u8[65536]{0}', space=vmem, size = 0x10000, scoped, tag = 'output window, operand 0, single buffered']
    %6 = vsyncpa [#allocation3], 0
    %7 = vsyncpa [#allocation4], 0
    // Predicated region
    $region2: #{tpu_custom_call.1} parent=1 // pred_check
      _
    $region3: #{tpu_custom_call.1} parent=1 // pred_check_branch
      %9 = sbr.rel (0) target = $region5
    $region4: #{tpu_custom_call.1} parent=1 // pred_region
      %s11 = ssub.s32 8192, 8192
      %12 = vsyncadd [#allocation3], %s11
      %s13 = sshll.u32 [#allocation2], 4
      %s14 = int_to_ptr.vmem [resolvable:$true] %s13
      %19 = dma.hbm_to_vmem [thread:$0]  %s0, 8192, %s14, [#allocation3], 256, 256, 16
    $region5: #{tpu_custom_call.1} parent=1 // pred_fallthru
      _
    // Predicated region
    $region6: #{tpu_custom_call.1} parent=1 // pred_check
      _
    $region7: #{tpu_custom_call.1} parent=1 // pred_check_branch
      %21 = sbr.rel (0) target = $region9
    $region8: #{tpu_custom_call.1} parent=1 // pred_region
      %22 = dma.done [#allocation3], 8192
    $region9: #{tpu_custom_call.1} parent=1 // pred_fallthru
      _
    %v23 = vld [vmem:[#allocation2] sm:$0xff]
    %v24 = vld [vmem:[#allocation2 + $0x8] sm:$0xff]
    %v25 = vld [vmem:[#allocation2 + $0x10] sm:$0xff]
    %v26 = vld [vmem:[#allocation2 + $0x18] sm:$0xff]
    %v27 = vld [vmem:[#allocation2 + $0x20] sm:$0xff]
    %v28 = vld [vmem:[#allocation2 + $0x28] sm:$0xff]
    %v29 = vld [vmem:[#allocation2 + $0x30] sm:$0xff]
    %v30 = vld [vmem:[#allocation2 + $0x38] sm:$0xff]
    %v31 = vld [vmem:[#allocation2 + $0x40] sm:$0xff]
    %v32 = vld [vmem:[#allocation2 + $0x48] sm:$0xff]
    %v33 = vld [vmem:[#allocation2 + $0x50] sm:$0xff]
    %v34 = vld [vmem:[#allocation2 + $0x58] sm:$0xff]
    %v35 = vld [vmem:[#allocation2 + $0x60] sm:$0xff]
    %v36 = vld [vmem:[#allocation2 + $0x68] sm:$0xff]
    %v37 = vld [vmem:[#allocation2 + $0x70] sm:$0xff]
    %v38 = vld [vmem:[#allocation2 + $0x78] sm:$0xff]
    %v39 = vld [vmem:[#allocation2 + $0x80] sm:$0xff]
    %v40 = vld [vmem:[#allocation2 + $0x88] sm:$0xff]
    %v41 = vld [vmem:[#allocation2 + $0x90] sm:$0xff]
    %v42 = vld [vmem:[#allocation2 + $0x98] sm:$0xff]
    %v43 = vld [vmem:[#allocation2 + $0xa0] sm:$0xff]
    %v44 = vld [vmem:[#allocation2 + $0xa8] sm:$0xff]
    %v45 = vld [vmem:[#allocation2 + $0xb0] sm:$0xff]
    %v46 = vld [vmem:[#allocation2 + $0xb8] sm:$0xff]
    %v47 = vld [vmem:[#allocation2 + $0xc0] sm:$0xff]
    %v48 = vld [vmem:[#allocation2 + $0xc8] sm:$0xff]
    %v49 = vld [vmem:[#allocation2 + $0xd0] sm:$0xff]
    %v50 = vld [vmem:[#allocation2 + $0xd8] sm:$0xff]
    %v51 = vld [vmem:[#allocation2 + $0xe0] sm:$0xff]
    %v52 = vld [vmem:[#allocation2 + $0xe8] sm:$0xff]
    %v53 = vld [vmem:[#allocation2 + $0xf0] sm:$0xff]
    %v54 = vld [vmem:[#allocation2 + $0xf8] sm:$0xff]
    %v55 = vld [vmem:[#allocation2 + $0x100] sm:$0xff]
    %v56 = vld [vmem:[#allocation2 + $0x108] sm:$0xff]
    %v57 = vld [vmem:[#allocation2 + $0x110] sm:$0xff]
    %v58 = vld [vmem:[#allocation2 + $0x118] sm:$0xff]
    %v59 = vld [vmem:[#allocation2 + $0x120] sm:$0xff]
    %v60 = vld [vmem:[#allocation2 + $0x128] sm:$0xff]
    %v61 = vld [vmem:[#allocation2 + $0x130] sm:$0xff]
    %v62 = vld [vmem:[#allocation2 + $0x138] sm:$0xff]
    %v63 = vld [vmem:[#allocation2 + $0x140] sm:$0xff]
    %v64 = vld [vmem:[#allocation2 + $0x148] sm:$0xff]
    %v65 = vld [vmem:[#allocation2 + $0x150] sm:$0xff]
    %v66 = vld [vmem:[#allocation2 + $0x158] sm:$0xff]
    %v67 = vld [vmem:[#allocation2 + $0x160] sm:$0xff]
    %v68 = vld [vmem:[#allocation2 + $0x168] sm:$0xff]
    %v69 = vld [vmem:[#allocation2 + $0x170] sm:$0xff]
    %v70 = vld [vmem:[#allocation2 + $0x178] sm:$0xff]
    %v71 = vld [vmem:[#allocation2 + $0x180] sm:$0xff]
    %v72 = vld [vmem:[#allocation2 + $0x188] sm:$0xff]
    %v73 = vld [vmem:[#allocation2 + $0x190] sm:$0xff]
    %v74 = vld [vmem:[#allocation2 + $0x198] sm:$0xff]
    %v75 = vld [vmem:[#allocation2 + $0x1a0] sm:$0xff]
    %v76 = vld [vmem:[#allocation2 + $0x1a8] sm:$0xff]
    %v77 = vld [vmem:[#allocation2 + $0x1b0] sm:$0xff]
    %v78 = vld [vmem:[#allocation2 + $0x1b8] sm:$0xff]
    %v79 = vld [vmem:[#allocation2 + $0x1c0] sm:$0xff]
    %v80 = vld [vmem:[#allocation2 + $0x1c8] sm:$0xff]
    %v81 = vld [vmem:[#allocation2 + $0x1d0] sm:$0xff]
    %v82 = vld [vmem:[#allocation2 + $0x1d8] sm:$0xff]
    %v83 = vld [vmem:[#allocation2 + $0x1e0] sm:$0xff]
    %v84 = vld [vmem:[#allocation2 + $0x1e8] sm:$0xff]
    %v85 = vld [vmem:[#allocation2 + $0x1f0] sm:$0xff]
    %v86 = vld [vmem:[#allocation2 + $0x1f8] sm:$0xff]
    %v151 = vcombine.high %v23, %v23
    %v152 = vcombine.high %v24, %v24
    %v153 = vcombine.high %v25, %v25
    %v154 = vcombine.high %v26, %v26
    %v155 = vcombine.high %v27, %v27
    %v156 = vcombine.high %v28, %v28
    %v157 = vcombine.high %v29, %v29
    %v158 = vcombine.high %v30, %v30
    %v159 = vcombine.high %v31, %v31
    %v160 = vcombine.high %v32, %v32
    %v161 = vcombine.high %v33, %v33
    %v162 = vcombine.high %v34, %v34
    %v163 = vcombine.high %v35, %v35
    %v164 = vcombine.high %v36, %v36
    %v165 = vcombine.high %v37, %v37
    %v166 = vcombine.high %v38, %v38
    %v167 = vcombine.high %v39, %v39
    %v168 = vcombine.high %v40, %v40
    %v169 = vcombine.high %v41, %v41
    %v170 = vcombine.high %v42, %v42
    %v171 = vcombine.high %v43, %v43
    %v172 = vcombine.high %v44, %v44
    %v173 = vcombine.high %v45, %v45
    %v174 = vcombine.high %v46, %v46
    %v175 = vcombine.high %v47, %v47
    %v176 = vcombine.high %v48, %v48
    %v177 = vcombine.high %v49, %v49
    %v178 = vcombine.high %v50, %v50
    %v179 = vcombine.high %v51, %v51
    %v180 = vcombine.high %v52, %v52
    %v181 = vcombine.high %v53, %v53
    %v182 = vcombine.high %v54, %v54
    %v183 = vcombine.high %v55, %v55
    %v184 = vcombine.high %v56, %v56
    %v185 = vcombine.high %v57, %v57
    %v186 = vcombine.high %v58, %v58
    %v187 = vcombine.high %v59, %v59
    %v188 = vcombine.high %v60, %v60
    %v189 = vcombine.high %v61, %v61
    %v190 = vcombine.high %v62, %v62
    %v191 = vcombine.high %v63, %v63
    %v192 = vcombine.high %v64, %v64
    %v193 = vcombine.high %v65, %v65
    %v194 = vcombine.high %v66, %v66
    %v195 = vcombine.high %v67, %v67
    %v196 = vcombine.high %v68, %v68
    %v197 = vcombine.high %v69, %v69
    %v198 = vcombine.high %v70, %v70
    %v199 = vcombine.high %v71, %v71
    %v200 = vcombine.high %v72, %v72
    %v201 = vcombine.high %v73, %v73
    %v202 = vcombine.high %v74, %v74
    %v203 = vcombine.high %v75, %v75
    %v204 = vcombine.high %v76, %v76
    %v205 = vcombine.high %v77, %v77
    %v206 = vcombine.high %v78, %v78
    %v207 = vcombine.high %v79, %v79
    %v208 = vcombine.high %v80, %v80
    %v209 = vcombine.high %v81, %v81
    %v210 = vcombine.high %v82, %v82
    %v211 = vcombine.high %v83, %v83
    %v212 = vcombine.high %v84, %v84
    %v213 = vcombine.high %v85, %v85
    %v214 = vcombine.high %v86, %v86
    %vm279 = vcmask 1043456
    %v280 = vsel %vm279, %v23, -inf
    %v281 = vrot.slane %v280, 4
    %v282 = vmax.f32 %v280, %v281
    %v283 = vrot.slane %v282, 2
    %v284 = vmax.f32 %v282, %v283
    %v285 = vrot.slane %v284, 1
    %v286 = vmax.f32 %v284, %v285
    %v287 = vsel %vm279, %v151, -inf
    %v288 = vrot.slane %v287, 4
    %v289 = vmax.f32 %v287, %v288
    %v290 = vrot.slane %v289, 2
    %v291 = vmax.f32 %v289, %v290
    %v292 = vrot.slane %v291, 1
    %v293 = vmax.f32 %v291, %v292
    %v294 = vsel %vm279, %v24, -inf
    %v295 = vrot.slane %v294, 4
    %v296 = vmax.f32 %v294, %v295
    %v297 = vrot.slane %v296, 2
    %v298 = vmax.f32 %v296, %v297
    %v299 = vrot.slane %v298, 1
    %v300 = vmax.f32 %v298, %v299
    %vm301 = vcmask 60416
    %v302 = vsel %vm301, %v152, -inf
    %v303 = vrot.slane %v302, 4
    %v304 = vmax.f32 %v302, %v303
    %v305 = vrot.slane %v304, 2
    %v306 = vmax.f32 %v304, %v305
    %v307 = vrot.slane %v306, 1
    %v308 = vmax.f32 %v306, %v307
    %v309 = vsel %vm279, %v25, -inf
    %v310 = vrot.slane %v309, 4
    %v311 = vmax.f32 %v309, %v310
    %v312 = vrot.slane %v311, 2
    %v313 = vmax.f32 %v311, %v312
    %v314 = vrot.slane %v313, 1
    %v315 = vmax.f32 %v313, %v314
    %v316 = vsel %vm279, %v153, -inf
    %v317 = vrot.slane %v316, 4
    %v318 = vmax.f32 %v316, %v317
    %v319 = vrot.slane %v318, 2
    %v320 = vmax.f32 %v318, %v319
    %v321 = vrot.slane %v320, 1
    %v322 = vmax.f32 %v320, %v321
    %v323 = vsel %vm279, %v26, -inf
    %v324 = vrot.slane %v323, 4
    %v325 = vmax.f32 %v323, %v324
    %v326 = vrot.slane %v325, 2
    %v327 = vmax.f32 %v325, %v326
    %v328 = vrot.slane %v327, 1
    %v329 = vmax.f32 %v327, %v328
    %v330 = vsel %vm301, %v154, -inf
    %v331 = vrot.slane %v330, 4
    %v332 = vmax.f32 %v330, %v331
    %v333 = vrot.slane %v332, 2
    %v334 = vmax.f32 %v332, %v333
    %v335 = vrot.slane %v334, 1
    %v336 = vmax.f32 %v334, %v335
    %v337 = vsel %vm279, %v27, -inf
    %v338 = vrot.slane %v337, 4
    %v339 = vmax.f32 %v337, %v338
    %v340 = vrot.slane %v339, 2
    %v341 = vmax.f32 %v339, %v340
    %v342 = vrot.slane %v341, 1
    %v343 = vmax.f32 %v341, %v342
    %v344 = vsel %vm279, %v155, -inf
    %v345 = vrot.slane %v344, 4
    %v346 = vmax.f32 %v344, %v345
    %v347 = vrot.slane %v346, 2
    %v348 = vmax.f32 %v346, %v347
    %v349 = vrot.slane %v348, 1
    %v350 = vmax.f32 %v348, %v349
    %v351 = vsel %vm279, %v28, -inf
    %v352 = vrot.slane %v351, 4
    %v353 = vmax.f32 %v351, %v352
    %v354 = vrot.slane %v353, 2
    %v355 = vmax.f32 %v353, %v354
    %v356 = vrot.slane %v355, 1
    %v357 = vmax.f32 %v355, %v356
    %v358 = vsel %vm301, %v156, -inf
    %v359 = vrot.slane %v358, 4
    %v360 = vmax.f32 %v358, %v359
    %v361 = vrot.slane %v360, 2
    %v362 = vmax.f32 %v360, %v361
    %v363 = vrot.slane %v362, 1
    %v364 = vmax.f32 %v362, %v363
    %v365 = vsel %vm279, %v29, -inf
    %v366 = vrot.slane %v365, 4
    %v367 = vmax.f32 %v365, %v366
    %v368 = vrot.slane %v367, 2
    %v369 = vmax.f32 %v367, %v368
    %v370 = vrot.slane %v369, 1
    %v371 = vmax.f32 %v369, %v370
    %v372 = vsel %vm279, %v157, -inf
    %v373 = vrot.slane %v372, 4
    %v374 = vmax.f32 %v372, %v373
    %v375 = vrot.slane %v374, 2
    %v376 = vmax.f32 %v374, %v375
    %v377 = vrot.slane %v376, 1
    %v378 = vmax.f32 %v376, %v377
    %v379 = vsel %vm279, %v30, -inf
    %v380 = vrot.slane %v379, 4
    %v381 = vmax.f32 %v379, %v380
    %v382 = vrot.slane %v381, 2
    %v383 = vmax.f32 %v381, %v382
    %v384 = vrot.slane %v383, 1
    %v385 = vmax.f32 %v383, %v384
    %v386 = vsel %vm301, %v158, -inf
    %v387 = vrot.slane %v386, 4
    %v388 = vmax.f32 %v386, %v387
    %v389 = vrot.slane %v388, 2
    %v390 = vmax.f32 %v388, %v389
    %v391 = vrot.slane %v390, 1
    %v392 = vmax.f32 %v390, %v391
    %v393 = vsel %vm279, %v31, -inf
    %v394 = vrot.slane %v393, 4
    %v395 = vmax.f32 %v393, %v394
    %v396 = vrot.slane %v395, 2
    %v397 = vmax.f32 %v395, %v396
    %v398 = vrot.slane %v397, 1
    %v399 = vmax.f32 %v397, %v398
    %v400 = vsel %vm279, %v159, -inf
    %v401 = vrot.slane %v400, 4
    %v402 = vmax.f32 %v400, %v401
    %v403 = vrot.slane %v402, 2
    %v404 = vmax.f32 %v402, %v403
    %v405 = vrot.slane %v404, 1
    %v406 = vmax.f32 %v404, %v405
    %v407 = vsel %vm279, %v32, -inf
    %v408 = vrot.slane %v407, 4
    %v409 = vmax.f32 %v407, %v408
    %v410 = vrot.slane %v409, 2
    %v411 = vmax.f32 %v409, %v410
    %v412 = vrot.slane %v411, 1
    %v413 = vmax.f32 %v411, %v412
    %v414 = vsel %vm301, %v160, -inf
    %v415 = vrot.slane %v414, 4
    %v416 = vmax.f32 %v414, %v415
    %v417 = vrot.slane %v416, 2
    %v418 = vmax.f32 %v416, %v417
    %v419 = vrot.slane %v418, 1
    %v420 = vmax.f32 %v418, %v419
    %v421 = vsel %vm279, %v33, -inf
    %v422 = vrot.slane %v421, 4
    %v423 = vmax.f32 %v421, %v422
    %v424 = vrot.slane %v423, 2
    %v425 = vmax.f32 %v423, %v424
    %v426 = vrot.slane %v425, 1
    %v427 = vmax.f32 %v425, %v426
    %v428 = vsel %vm279, %v161, -inf
    %v429 = vrot.slane %v428, 4
    %v430 = vmax.f32 %v428, %v429
    %v431 = vrot.slane %v430, 2
    %v432 = vmax.f32 %v430, %v431
    %v433 = vrot.slane %v432, 1
    %v434 = vmax.f32 %v432, %v433
    %v435 = vsel %vm279, %v34, -inf
    %v436 = vrot.slane %v435, 4
    %v437 = vmax.f32 %v435, %v436
    %v438 = vrot.slane %v437, 2
    %v439 = vmax.f32 %v437, %v438
    %v440 = vrot.slane %v439, 1
    %v441 = vmax.f32 %v439, %v440
    %v442 = vsel %vm301, %v162, -inf
    %v443 = vrot.slane %v442, 4
    %v444 = vmax.f32 %v442, %v443
    %v445 = vrot.slane %v444, 2
    %v446 = vmax.f32 %v444, %v445
    %v447 = vrot.slane %v446, 1
    %v448 = vmax.f32 %v446, %v447
    %v449 = vsel %vm279, %v35, -inf
    %v450 = vrot.slane %v449, 4
    %v451 = vmax.f32 %v449, %v450
    %v452 = vrot.slane %v451, 2
    %v453 = vmax.f32 %v451, %v452
    %v454 = vrot.slane %v453, 1
    %v455 = vmax.f32 %v453, %v454
    %v456 = vsel %vm279, %v163, -inf
    %v457 = vrot.slane %v456, 4
    %v458 = vmax.f32 %v456, %v457
    %v459 = vrot.slane %v458, 2
    %v460 = vmax.f32 %v458, %v459
    %v461 = vrot.slane %v460, 1
    %v462 = vmax.f32 %v460, %v461
    %v463 = vsel %vm279, %v36, -inf
    %v464 = vrot.slane %v463, 4
    %v465 = vmax.f32 %v463, %v464
    %v466 = vrot.slane %v465, 2
    %v467 = vmax.f32 %v465, %v466
    %v468 = vrot.slane %v467, 1
    %v469 = vmax.f32 %v467, %v468
    %v470 = vsel %vm301, %v164, -inf
    %v471 = vrot.slane %v470, 4
    %v472 = vmax.f32 %v470, %v471
    %v473 = vrot.slane %v472, 2
    %v474 = vmax.f32 %v472, %v473
    %v475 = vrot.slane %v474, 1
    %v476 = vmax.f32 %v474, %v475
    %v477 = vsel %vm279, %v37, -inf
    %v478 = vrot.slane %v477, 4
    %v479 = vmax.f32 %v477, %v478
    %v480 = vrot.slane %v479, 2
    %v481 = vmax.f32 %v479, %v480
    %v482 = vrot.slane %v481, 1
    %v483 = vmax.f32 %v481, %v482
    %v484 = vsel %vm279, %v165, -inf
    %v485 = vrot.slane %v484, 4
    %v486 = vmax.f32 %v484, %v485
    %v487 = vrot.slane %v486, 2
    %v488 = vmax.f32 %v486, %v487
    %v489 = vrot.slane %v488, 1
    %v490 = vmax.f32 %v488, %v489
    %v491 = vsel %vm279, %v38, -inf
    %v492 = vrot.slane %v491, 4
    %v493 = vmax.f32 %v491, %v492
    %v494 = vrot.slane %v493, 2
    %v495 = vmax.f32 %v493, %v494
    %v496 = vrot.slane %v495, 1
    %v497 = vmax.f32 %v495, %v496
    %v498 = vsel %vm301, %v166, -inf
    %v499 = vrot.slane %v498, 4
    %v500 = vmax.f32 %v498, %v499
    %v501 = vrot.slane %v500, 2
    %v502 = vmax.f32 %v500, %v501
    %v503 = vrot.slane %v502, 1
    %v504 = vmax.f32 %v502, %v503
    %v505 = vsel %vm279, %v39, -inf
    %v506 = vrot.slane %v505, 4
    %v507 = vmax.f32 %v505, %v506
    %v508 = vrot.slane %v507, 2
    %v509 = vmax.f32 %v507, %v508
    %v510 = vrot.slane %v509, 1
    %v511 = vmax.f32 %v509, %v510
    %v512 = vsel %vm279, %v167, -inf
    %v513 = vrot.slane %v512, 4
    %v514 = vmax.f32 %v512, %v513
    %v515 = vrot.slane %v514, 2
    %v516 = vmax.f32 %v514, %v515
    %v517 = vrot.slane %v516, 1
    %v518 = vmax.f32 %v516, %v517
    %v519 = vsel %vm279, %v40, -inf
    %v520 = vrot.slane %v519, 4
    %v521 = vmax.f32 %v519, %v520
    %v522 = vrot.slane %v521, 2
    %v523 = vmax.f32 %v521, %v522
    %v524 = vrot.slane %v523, 1
    %v525 = vmax.f32 %v523, %v524
    %v526 = vsel %vm301, %v168, -inf
    %v527 = vrot.slane %v526, 4
    %v528 = vmax.f32 %v526, %v527
    %v529 = vrot.slane %v528, 2
    %v530 = vmax.f32 %v528, %v529
    %v531 = vrot.slane %v530, 1
    %v532 = vmax.f32 %v530, %v531
    %v533 = vsel %vm279, %v41, -inf
    %v534 = vrot.slane %v533, 4
    %v535 = vmax.f32 %v533, %v534
    %v536 = vrot.slane %v535, 2
    %v537 = vmax.f32 %v535, %v536
    %v538 = vrot.slane %v537, 1
    %v539 = vmax.f32 %v537, %v538
    %v540 = vsel %vm279, %v169, -inf
    %v541 = vrot.slane %v540, 4
    %v542 = vmax.f32 %v540, %v541
    %v543 = vrot.slane %v542, 2
    %v544 = vmax.f32 %v542, %v543
    %v545 = vrot.slane %v544, 1
    %v546 = vmax.f32 %v544, %v545
    %v547 = vsel %vm279, %v42, -inf
    %v548 = vrot.slane %v547, 4
    %v549 = vmax.f32 %v547, %v548
    %v550 = vrot.slane %v549, 2
    %v551 = vmax.f32 %v549, %v550
    %v552 = vrot.slane %v551, 1
    %v553 = vmax.f32 %v551, %v552
    %v554 = vsel %vm301, %v170, -inf
    %v555 = vrot.slane %v554, 4
    %v556 = vmax.f32 %v554, %v555
    %v557 = vrot.slane %v556, 2
    %v558 = vmax.f32 %v556, %v557
    %v559 = vrot.slane %v558, 1
    %v560 = vmax.f32 %v558, %v559
    %v561 = vsel %vm279, %v43, -inf
    %v562 = vrot.slane %v561, 4
    %v563 = vmax.f32 %v561, %v562
    %v564 = vrot.slane %v563, 2
    %v565 = vmax.f32 %v563, %v564
    %v566 = vrot.slane %v565, 1
    %v567 = vmax.f32 %v565, %v566
    %v568 = vsel %vm279, %v171, -inf
    %v569 = vrot.slane %v568, 4
    %v570 = vmax.f32 %v568, %v569
    %v571 = vrot.slane %v570, 2
    %v572 = vmax.f32 %v570, %v571
    %v573 = vrot.slane %v572, 1
    %v574 = vmax.f32 %v572, %v573
    %v575 = vsel %vm279, %v44, -inf
    %v576 = vrot.slane %v575, 4
    %v577 = vmax.f32 %v575, %v576
    %v578 = vrot.slane %v577, 2
    %v579 = vmax.f32 %v577, %v578
    %v580 = vrot.slane %v579, 1
    %v581 = vmax.f32 %v579, %v580
    %v582 = vsel %vm301, %v172, -inf
    %v583 = vrot.slane %v582, 4
    %v584 = vmax.f32 %v582, %v583
    %v585 = vrot.slane %v584, 2
    %v586 = vmax.f32 %v584, %v585
    %v587 = vrot.slane %v586, 1
    %v588 = vmax.f32 %v586, %v587
    %v589 = vsel %vm279, %v45, -inf
    %v590 = vrot.slane %v589, 4
    %v591 = vmax.f32 %v589, %v590
    %v592 = vrot.slane %v591, 2
    %v593 = vmax.f32 %v591, %v592
    %v594 = vrot.slane %v593, 1
    %v595 = vmax.f32 %v593, %v594
    %v596 = vsel %vm279, %v173, -inf
    %v597 = vrot.slane %v596, 4
    %v598 = vmax.f32 %v596, %v597
    %v599 = vrot.slane %v598, 2
    %v600 = vmax.f32 %v598, %v599
    %v601 = vrot.slane %v600, 1
    %v602 = vmax.f32 %v600, %v601
    %v603 = vsel %vm279, %v46, -inf
    %v604 = vrot.slane %v603, 4
    %v605 = vmax.f32 %v603, %v604
    %v606 = vrot.slane %v605, 2
    %v607 = vmax.f32 %v605, %v606
    %v608 = vrot.slane %v607, 1
    %v609 = vmax.f32 %v607, %v608
    %v610 = vsel %vm301, %v174, -inf
    %v611 = vrot.slane %v610, 4
    %v612 = vmax.f32 %v610, %v611
    %v613 = vrot.slane %v612, 2
    %v614 = vmax.f32 %v612, %v613
    %v615 = vrot.slane %v614, 1
    %v616 = vmax.f32 %v614, %v615
    %v617 = vsel %vm279, %v47, -inf
    %v618 = vrot.slane %v617, 4
    %v619 = vmax.f32 %v617, %v618
    %v620 = vrot.slane %v619, 2
    %v621 = vmax.f32 %v619, %v620
    %v622 = vrot.slane %v621, 1
    %v623 = vmax.f32 %v621, %v622
    %v624 = vsel %vm279, %v175, -inf
    %v625 = vrot.slane %v624, 4
    %v626 = vmax.f32 %v624, %v625
    %v627 = vrot.slane %v626, 2
    %v628 = vmax.f32 %v626, %v627
    %v629 = vrot.slane %v628, 1
    %v630 = vmax.f32 %v628, %v629
    %v631 = vsel %vm279, %v48, -inf
    %v632 = vrot.slane %v631, 4
    %v633 = vmax.f32 %v631, %v632
    %v634 = vrot.slane %v633, 2
    %v635 = vmax.f32 %v633, %v634
    %v636 = vrot.slane %v635, 1
    %v637 = vmax.f32 %v635, %v636
    %v638 = vsel %vm301, %v176, -inf
    %v639 = vrot.slane %v638, 4
    %v640 = vmax.f32 %v638, %v639
    %v641 = vrot.slane %v640, 2
    %v642 = vmax.f32 %v640, %v641
    %v643 = vrot.slane %v642, 1
    %v644 = vmax.f32 %v642, %v643
    %v645 = vsel %vm279, %v49, -inf
    %v646 = vrot.slane %v645, 4
    %v647 = vmax.f32 %v645, %v646
    %v648 = vrot.slane %v647, 2
    %v649 = vmax.f32 %v647, %v648
    %v650 = vrot.slane %v649, 1
    %v651 = vmax.f32 %v649, %v650
    %v652 = vsel %vm279, %v177, -inf
    %v653 = vrot.slane %v652, 4
    %v654 = vmax.f32 %v652, %v653
    %v655 = vrot.slane %v654, 2
    %v656 = vmax.f32 %v654, %v655
    %v657 = vrot.slane %v656, 1
    %v658 = vmax.f32 %v656, %v657
    %v659 = vsel %vm279, %v50, -inf
    %v660 = vrot.slane %v659, 4
    %v661 = vmax.f32 %v659, %v660
    %v662 = vrot.slane %v661, 2
    %v663 = vmax.f32 %v661, %v662
    %v664 = vrot.slane %v663, 1
    %v665 = vmax.f32 %v663, %v664
    %v666 = vsel %vm301, %v178, -inf
    %v667 = vrot.slane %v666, 4
    %v668 = vmax.f32 %v666, %v667
    %v669 = vrot.slane %v668, 2
    %v670 = vmax.f32 %v668, %v669
    %v671 = vrot.slane %v670, 1
    %v672 = vmax.f32 %v670, %v671
    %v673 = vsel %vm279, %v51, -inf
    %v674 = vrot.slane %v673, 4
    %v675 = vmax.f32 %v673, %v674
    %v676 = vrot.slane %v675, 2
    %v677 = vmax.f32 %v675, %v676
    %v678 = vrot.slane %v677, 1
    %v679 = vmax.f32 %v677, %v678
    %v680 = vsel %vm279, %v179, -inf
    %v681 = vrot.slane %v680, 4
    %v682 = vmax.f32 %v680, %v681
    %v683 = vrot.slane %v682, 2
    %v684 = vmax.f32 %v682, %v683
    %v685 = vrot.slane %v684, 1
    %v686 = vmax.f32 %v684, %v685
    %v687 = vsel %vm279, %v52, -inf
    %v688 = vrot.slane %v687, 4
    %v689 = vmax.f32 %v687, %v688
    %v690 = vrot.slane %v689, 2
    %v691 = vmax.f32 %v689, %v690
    %v692 = vrot.slane %v691, 1
    %v693 = vmax.f32 %v691, %v692
    %v694 = vsel %vm301, %v180, -inf
    %v695 = vrot.slane %v694, 4
    %v696 = vmax.f32 %v694, %v695
    %v697 = vrot.slane %v696, 2
    %v698 = vmax.f32 %v696, %v697
    %v699 = vrot.slane %v698, 1
    %v700 = vmax.f32 %v698, %v699
    %v701 = vsel %vm279, %v53, -inf
    %v702 = vrot.slane %v701, 4
    %v703 = vmax.f32 %v701, %v702
    %v704 = vrot.slane %v703, 2
    %v705 = vmax.f32 %v703, %v704
    %v706 = vrot.slane %v705, 1
    %v707 = vmax.f32 %v705, %v706
    %v708 = vsel %vm279, %v181, -inf
    %v709 = vrot.slane %v708, 4
    %v710 = vmax.f32 %v708, %v709
    %v711 = vrot.slane %v710, 2
    %v712 = vmax.f32 %v710, %v711
    %v713 = vrot.slane %v712, 1
    %v714 = vmax.f32 %v712, %v713
    %v715 = vsel %vm279, %v54, -inf
    %v716 = vrot.slane %v715, 4
    %v717 = vmax.f32 %v715, %v716
    %v718 = vrot.slane %v717, 2
    %v719 = vmax.f32 %v717, %v718
    %v720 = vrot.slane %v719, 1
    %v721 = vmax.f32 %v719, %v720
    %v722 = vsel %vm301, %v182, -inf
    %v723 = vrot.slane %v722, 4
    %v724 = vmax.f32 %v722, %v723
    %v725 = vrot.slane %v724, 2
    %v726 = vmax.f32 %v724, %v725
    %v727 = vrot.slane %v726, 1
    %v728 = vmax.f32 %v726, %v727
    %v729 = vsel %vm279, %v55, -inf
    %v730 = vrot.slane %v729, 4
    %v731 = vmax.f32 %v729, %v730
    %v732 = vrot.slane %v731, 2
    %v733 = vmax.f32 %v731, %v732
    %v734 = vrot.slane %v733, 1
    %v735 = vmax.f32 %v733, %v734
    %v736 = vsel %vm279, %v183, -inf
    %v737 = vrot.slane %v736, 4
    %v738 = vmax.f32 %v736, %v737
    %v739 = vrot.slane %v738, 2
    %v740 = vmax.f32 %v738, %v739
    %v741 = vrot.slane %v740, 1
    %v742 = vmax.f32 %v740, %v741
    %v743 = vsel %vm279, %v56, -inf
    %v744 = vrot.slane %v743, 4
    %v745 = vmax.f32 %v743, %v744
    %v746 = vrot.slane %v745, 2
    %v747 = vmax.f32 %v745, %v746
    %v748 = vrot.slane %v747, 1
    %v749 = vmax.f32 %v747, %v748
    %v750 = vsel %vm301, %v184, -inf
    %v751 = vrot.slane %v750, 4
    %v752 = vmax.f32 %v750, %v751
    %v753 = vrot.slane %v752, 2
    %v754 = vmax.f32 %v752, %v753
    %v755 = vrot.slane %v754, 1
    %v756 = vmax.f32 %v754, %v755
    %v757 = vsel %vm279, %v57, -inf
    %v758 = vrot.slane %v757, 4
    %v759 = vmax.f32 %v757, %v758
    %v760 = vrot.slane %v759, 2
    %v761 = vmax.f32 %v759, %v760
    %v762 = vrot.slane %v761, 1
    %v763 = vmax.f32 %v761, %v762
    %v764 = vsel %vm279, %v185, -inf
    %v765 = vrot.slane %v764, 4
    %v766 = vmax.f32 %v764, %v765
    %v767 = vrot.slane %v766, 2
    %v768 = vmax.f32 %v766, %v767
    %v769 = vrot.slane %v768, 1
    %v770 = vmax.f32 %v768, %v769
    %v771 = vsel %vm279, %v58, -inf
    %v772 = vrot.slane %v771, 4
    %v773 = vmax.f32 %v771, %v772
    %v774 = vrot.slane %v773, 2
    %v775 = vmax.f32 %v773, %v774
    %v776 = vrot.slane %v775, 1
    %v777 = vmax.f32 %v775, %v776
    %v778 = vsel %vm301, %v186, -inf
    %v779 = vrot.slane %v778, 4
    %v780 = vmax.f32 %v778, %v779
    %v781 = vrot.slane %v780, 2
    %v782 = vmax.f32 %v780, %v781
    %v783 = vrot.slane %v782, 1
    %v784 = vmax.f32 %v782, %v783
    %v785 = vsel %vm279, %v59, -inf
    %v786 = vrot.slane %v785, 4
    %v787 = vmax.f32 %v785, %v786
    %v788 = vrot.slane %v787, 2
    %v789 = vmax.f32 %v787, %v788
    %v790 = vrot.slane %v789, 1
    %v791 = vmax.f32 %v789, %v790
    %v792 = vsel %vm279, %v187, -inf
    %v793 = vrot.slane %v792, 4
    %v794 = vmax.f32 %v792, %v793
    %v795 = vrot.slane %v794, 2
    %v796 = vmax.f32 %v794, %v795
    %v797 = vrot.slane %v796, 1
    %v798 = vmax.f32 %v796, %v797
    %v799 = vsel %vm279, %v60, -inf
    %v800 = vrot.slane %v799, 4
    %v801 = vmax.f32 %v799, %v800
    %v802 = vrot.slane %v801, 2
    %v803 = vmax.f32 %v801, %v802
    %v804 = vrot.slane %v803, 1
    %v805 = vmax.f32 %v803, %v804
    %v806 = vsel %vm301, %v188, -inf
    %v807 = vrot.slane %v806, 4
    %v808 = vmax.f32 %v806, %v807
    %v809 = vrot.slane %v808, 2
    %v810 = vmax.f32 %v808, %v809
    %v811 = vrot.slane %v810, 1
    %v812 = vmax.f32 %v810, %v811
    %v813 = vsel %vm279, %v61, -inf
    %v814 = vrot.slane %v813, 4
    %v815 = vmax.f32 %v813, %v814
    %v816 = vrot.slane %v815, 2
    %v817 = vmax.f32 %v815, %v816
    %v818 = vrot.slane %v817, 1
    %v819 = vmax.f32 %v817, %v818
    %v820 = vsel %vm279, %v189, -inf
    %v821 = vrot.slane %v820, 4
    %v822 = vmax.f32 %v820, %v821
    %v823 = vrot.slane %v822, 2
    %v824 = vmax.f32 %v822, %v823
    %v825 = vrot.slane %v824, 1
    %v826 = vmax.f32 %v824, %v825
    %v827 = vsel %vm279, %v62, -inf
    %v828 = vrot.slane %v827, 4
    %v829 = vmax.f32 %v827, %v828
    %v830 = vrot.slane %v829, 2
    %v831 = vmax.f32 %v829, %v830
    %v832 = vrot.slane %v831, 1
    %v833 = vmax.f32 %v831, %v832
    %v834 = vsel %vm301, %v190, -inf
    %v835 = vrot.slane %v834, 4
    %v836 = vmax.f32 %v834, %v835
    %v837 = vrot.slane %v836, 2
    %v838 = vmax.f32 %v836, %v837
    %v839 = vrot.slane %v838, 1
    %v840 = vmax.f32 %v838, %v839
    %v841 = vsel %vm279, %v63, -inf
    %v842 = vrot.slane %v841, 4
    %v843 = vmax.f32 %v841, %v842
    %v844 = vrot.slane %v843, 2
    %v845 = vmax.f32 %v843, %v844
    %v846 = vrot.slane %v845, 1
    %v847 = vmax.f32 %v845, %v846
    %v848 = vsel %vm279, %v191, -inf
    %v849 = vrot.slane %v848, 4
    %v850 = vmax.f32 %v848, %v849
    %v851 = vrot.slane %v850, 2
    %v852 = vmax.f32 %v850, %v851
    %v853 = vrot.slane %v852, 1
    %v854 = vmax.f32 %v852, %v853
    %v855 = vsel %vm279, %v64, -inf
    %v856 = vrot.slane %v855, 4
    %v857 = vmax.f32 %v855, %v856
    %v858 = vrot.slane %v857, 2
    %v859 = vmax.f32 %v857, %v858
    %v860 = vrot.slane %v859, 1
    %v861 = vmax.f32 %v859, %v860
    %v862 = vsel %vm301, %v192, -inf
    %v863 = vrot.slane %v862, 4
    %v864 = vmax.f32 %v862, %v863
    %v865 = vrot.slane %v864, 2
    %v866 = vmax.f32 %v864, %v865
    %v867 = vrot.slane %v866, 1
    %v868 = vmax.f32 %v866, %v867
    %v869 = vsel %vm279, %v65, -inf
    %v870 = vrot.slane %v869, 4
    %v871 = vmax.f32 %v869, %v870
    %v872 = vrot.slane %v871, 2
    %v873 = vmax.f32 %v871, %v872
    %v874 = vrot.slane %v873, 1
    %v875 = vmax.f32 %v873, %v874
    %v876 = vsel %vm279, %v193, -inf
    %v877 = vrot.slane %v876, 4
    %v878 = vmax.f32 %v876, %v877
    %v879 = vrot.slane %v878, 2
    %v880 = vmax.f32 %v878, %v879
    %v881 = vrot.slane %v880, 1
    %v882 = vmax.f32 %v880, %v881
    %v883 = vsel %vm279, %v66, -inf
    %v884 = vrot.slane %v883, 4
    %v885 = vmax.f32 %v883, %v884
    %v886 = vrot.slane %v885, 2
    %v887 = vmax.f32 %v885, %v886
    %v888 = vrot.slane %v887, 1
    %v889 = vmax.f32 %v887, %v888
    %v890 = vsel %vm301, %v194, -inf
    %v891 = vrot.slane %v890, 4
    %v892 = vmax.f32 %v890, %v891
    %v893 = vrot.slane %v892, 2
    %v894 = vmax.f32 %v892, %v893
    %v895 = vrot.slane %v894, 1
    %v896 = vmax.f32 %v894, %v895
    %v897 = vsel %vm279, %v67, -inf
    %v898 = vrot.slane %v897, 4
    %v899 = vmax.f32 %v897, %v898
    %v900 = vrot.slane %v899, 2
    %v901 = vmax.f32 %v899, %v900
    %v902 = vrot.slane %v901, 1
    %v903 = vmax.f32 %v901, %v902
    %v904 = vsel %vm279, %v195, -inf
    %v905 = vrot.slane %v904, 4
    %v906 = vmax.f32 %v904, %v905
    %v907 = vrot.slane %v906, 2
    %v908 = vmax.f32 %v906, %v907
    %v909 = vrot.slane %v908, 1
    %v910 = vmax.f32 %v908, %v909
    %v911 = vsel %vm279, %v68, -inf
    %v912 = vrot.slane %v911, 4
    %v913 = vmax.f32 %v911, %v912
    %v914 = vrot.slane %v913, 2
    %v915 = vmax.f32 %v913, %v914
    %v916 = vrot.slane %v915, 1
    %v917 = vmax.f32 %v915, %v916
    %v918 = vsel %vm301, %v196, -inf
    %v919 = vrot.slane %v918, 4
    %v920 = vmax.f32 %v918, %v919
    %v921 = vrot.slane %v920, 2
    %v922 = vmax.f32 %v920, %v921
    %v923 = vrot.slane %v922, 1
    %v924 = vmax.f32 %v922, %v923
    %v925 = vsel %vm279, %v69, -inf
    %v926 = vrot.slane %v925, 4
    %v927 = vmax.f32 %v925, %v926
    %v928 = vrot.slane %v927, 2
    %v929 = vmax.f32 %v927, %v928
    %v930 = vrot.slane %v929, 1
    %v931 = vmax.f32 %v929, %v930
    %v932 = vsel %vm279, %v197, -inf
    %v933 = vrot.slane %v932, 4
    %v934 = vmax.f32 %v932, %v933
    %v935 = vrot.slane %v934, 2
    %v936 = vmax.f32 %v934, %v935
    %v937 = vrot.slane %v936, 1
    %v938 = vmax.f32 %v936, %v937
    %v939 = vsel %vm279, %v70, -inf
    %v940 = vrot.slane %v939, 4
    %v941 = vmax.f32 %v939, %v940
    %v942 = vrot.slane %v941, 2
    %v943 = vmax.f32 %v941, %v942
    %v944 = vrot.slane %v943, 1
    %v945 = vmax.f32 %v943, %v944
    %v946 = vsel %vm301, %v198, -inf
    %v947 = vrot.slane %v946, 4
    %v948 = vmax.f32 %v946, %v947
    %v949 = vrot.slane %v948, 2
    %v950 = vmax.f32 %v948, %v949
    %v951 = vrot.slane %v950, 1
    %v952 = vmax.f32 %v950, %v951
    %v953 = vsel %vm279, %v71, -inf
    %v954 = vrot.slane %v953, 4
    %v955 = vmax.f32 %v953, %v954
    %v956 = vrot.slane %v955, 2
    %v957 = vmax.f32 %v955, %v956
    %v958 = vrot.slane %v957, 1
    %v959 = vmax.f32 %v957, %v958
    %v960 = vsel %vm279, %v199, -inf
    %v961 = vrot.slane %v960, 4
    %v962 = vmax.f32 %v960, %v961
    %v963 = vrot.slane %v962, 2
    %v964 = vmax.f32 %v962, %v963
    %v965 = vrot.slane %v964, 1
    %v966 = vmax.f32 %v964, %v965
    %v967 = vsel %vm279, %v72, -inf
    %v968 = vrot.slane %v967, 4
    %v969 = vmax.f32 %v967, %v968
    %v970 = vrot.slane %v969, 2
    %v971 = vmax.f32 %v969, %v970
    %v972 = vrot.slane %v971, 1
    %v973 = vmax.f32 %v971, %v972
    %v974 = vsel %vm301, %v200, -inf
    %v975 = vrot.slane %v974, 4
    %v976 = vmax.f32 %v974, %v975
    %v977 = vrot.slane %v976, 2
    %v978 = vmax.f32 %v976, %v977
    %v979 = vrot.slane %v978, 1
    %v980 = vmax.f32 %v978, %v979
    %v981 = vsel %vm279, %v73, -inf
    %v982 = vrot.slane %v981, 4
    %v983 = vmax.f32 %v981, %v982
    %v984 = vrot.slane %v983, 2
    %v985 = vmax.f32 %v983, %v984
    %v986 = vrot.slane %v985, 1
    %v987 = vmax.f32 %v985, %v986
    %v988 = vsel %vm279, %v201, -inf
    %v989 = vrot.slane %v988, 4
    %v990 = vmax.f32 %v988, %v989
    %v991 = vrot.slane %v990, 2
    %v992 = vmax.f32 %v990, %v991
    %v993 = vrot.slane %v992, 1
    %v994 = vmax.f32 %v992, %v993
    %v995 = vsel %vm279, %v74, -inf
    %v996 = vrot.slane %v995, 4
    %v997 = vmax.f32 %v995, %v996
    %v998 = vrot.slane %v997, 2
    %v999 = vmax.f32 %v997, %v998
    %v1000 = vrot.slane %v999, 1
    %v1001 = vmax.f32 %v999, %v1000
    %v1002 = vsel %vm301, %v202, -inf
    %v1003 = vrot.slane %v1002, 4
    %v1004 = vmax.f32 %v1002, %v1003
    %v1005 = vrot.slane %v1004, 2
    %v1006 = vmax.f32 %v1004, %v1005
    %v1007 = vrot.slane %v1006, 1
    %v1008 = vmax.f32 %v1006, %v1007
    %v1009 = vsel %vm279, %v75, -inf
    %v1010 = vrot.slane %v1009, 4
    %v1011 = vmax.f32 %v1009, %v1010
    %v1012 = vrot.slane %v1011, 2
    %v1013 = vmax.f32 %v1011, %v1012
    %v1014 = vrot.slane %v1013, 1
    %v1015 = vmax.f32 %v1013, %v1014
    %v1016 = vsel %vm279, %v203, -inf
    %v1017 = vrot.slane %v1016, 4
    %v1018 = vmax.f32 %v1016, %v1017
    %v1019 = vrot.slane %v1018, 2
    %v1020 = vmax.f32 %v1018, %v1019
    %v1021 = vrot.slane %v1020, 1
    %v1022 = vmax.f32 %v1020, %v1021
    %v1023 = vsel %vm279, %v76, -inf
    %v1024 = vrot.slane %v1023, 4
    %v1025 = vmax.f32 %v1023, %v1024
    %v1026 = vrot.slane %v1025, 2
    %v1027 = vmax.f32 %v1025, %v1026
    %v1028 = vrot.slane %v1027, 1
    %v1029 = vmax.f32 %v1027, %v1028
    %v1030 = vsel %vm301, %v204, -inf
    %v1031 = vrot.slane %v1030, 4
    %v1032 = vmax.f32 %v1030, %v1031
    %v1033 = vrot.slane %v1032, 2
    %v1034 = vmax.f32 %v1032, %v1033
    %v1035 = vrot.slane %v1034, 1
    %v1036 = vmax.f32 %v1034, %v1035
    %v1037 = vsel %vm279, %v77, -inf
    %v1038 = vrot.slane %v1037, 4
    %v1039 = vmax.f32 %v1037, %v1038
    %v1040 = vrot.slane %v1039, 2
    %v1041 = vmax.f32 %v1039, %v1040
    %v1042 = vrot.slane %v1041, 1
    %v1043 = vmax.f32 %v1041, %v1042
    %v1044 = vsel %vm279, %v205, -inf
    %v1045 = vrot.slane %v1044, 4
    %v1046 = vmax.f32 %v1044, %v1045
    %v1047 = vrot.slane %v1046, 2
    %v1048 = vmax.f32 %v1046, %v1047
    %v1049 = vrot.slane %v1048, 1
    %v1050 = vmax.f32 %v1048, %v1049
    %v1051 = vsel %vm279, %v78, -inf
    %v1052 = vrot.slane %v1051, 4
    %v1053 = vmax.f32 %v1051, %v1052
    %v1054 = vrot.slane %v1053, 2
    %v1055 = vmax.f32 %v1053, %v1054
    %v1056 = vrot.slane %v1055, 1
    %v1057 = vmax.f32 %v1055, %v1056
    %v1058 = vsel %vm301, %v206, -inf
    %v1059 = vrot.slane %v1058, 4
    %v1060 = vmax.f32 %v1058, %v1059
    %v1061 = vrot.slane %v1060, 2
    %v1062 = vmax.f32 %v1060, %v1061
    %v1063 = vrot.slane %v1062, 1
    %v1064 = vmax.f32 %v1062, %v1063
    %v1065 = vsel %vm279, %v79, -inf
    %v1066 = vrot.slane %v1065, 4
    %v1067 = vmax.f32 %v1065, %v1066
    %v1068 = vrot.slane %v1067, 2
    %v1069 = vmax.f32 %v1067, %v1068
    %v1070 = vrot.slane %v1069, 1
    %v1071 = vmax.f32 %v1069, %v1070
    %v1072 = vsel %vm279, %v207, -inf
    %v1073 = vrot.slane %v1072, 4
    %v1074 = vmax.f32 %v1072, %v1073
    %v1075 = vrot.slane %v1074, 2
    %v1076 = vmax.f32 %v1074, %v1075
    %v1077 = vrot.slane %v1076, 1
    %v1078 = vmax.f32 %v1076, %v1077
    %v1079 = vsel %vm279, %v80, -inf
    %v1080 = vrot.slane %v1079, 4
    %v1081 = vmax.f32 %v1079, %v1080
    %v1082 = vrot.slane %v1081, 2
    %v1083 = vmax.f32 %v1081, %v1082
    %v1084 = vrot.slane %v1083, 1
    %v1085 = vmax.f32 %v1083, %v1084
    %v1086 = vsel %vm301, %v208, -inf
    %v1087 = vrot.slane %v1086, 4
    %v1088 = vmax.f32 %v1086, %v1087
    %v1089 = vrot.slane %v1088, 2
    %v1090 = vmax.f32 %v1088, %v1089
    %v1091 = vrot.slane %v1090, 1
    %v1092 = vmax.f32 %v1090, %v1091
    %v1093 = vsel %vm279, %v81, -inf
    %v1094 = vrot.slane %v1093, 4
    %v1095 = vmax.f32 %v1093, %v1094
    %v1096 = vrot.slane %v1095, 2
    %v1097 = vmax.f32 %v1095, %v1096
    %v1098 = vrot.slane %v1097, 1
    %v1099 = vmax.f32 %v1097, %v1098
    %v1100 = vsel %vm279, %v209, -inf
    %v1101 = vrot.slane %v1100, 4
    %v1102 = vmax.f32 %v1100, %v1101
    %v1103 = vrot.slane %v1102, 2
    %v1104 = vmax.f32 %v1102, %v1103
    %v1105 = vrot.slane %v1104, 1
    %v1106 = vmax.f32 %v1104, %v1105
    %v1107 = vsel %vm279, %v82, -inf
    %v1108 = vrot.slane %v1107, 4
    %v1109 = vmax.f32 %v1107, %v1108
    %v1110 = vrot.slane %v1109, 2
    %v1111 = vmax.f32 %v1109, %v1110
    %v1112 = vrot.slane %v1111, 1
    %v1113 = vmax.f32 %v1111, %v1112
    %v1114 = vsel %vm301, %v210, -inf
    %v1115 = vrot.slane %v1114, 4
    %v1116 = vmax.f32 %v1114, %v1115
    %v1117 = vrot.slane %v1116, 2
    %v1118 = vmax.f32 %v1116, %v1117
    %v1119 = vrot.slane %v1118, 1
    %v1120 = vmax.f32 %v1118, %v1119
    %v1121 = vsel %vm279, %v83, -inf
    %v1122 = vrot.slane %v1121, 4
    %v1123 = vmax.f32 %v1121, %v1122
    %v1124 = vrot.slane %v1123, 2
    %v1125 = vmax.f32 %v1123, %v1124
    %v1126 = vrot.slane %v1125, 1
    %v1127 = vmax.f32 %v1125, %v1126
    %v1128 = vsel %vm279, %v211, -inf
    %v1129 = vrot.slane %v1128, 4
    %v1130 = vmax.f32 %v1128, %v1129
    %v1131 = vrot.slane %v1130, 2
    %v1132 = vmax.f32 %v1130, %v1131
    %v1133 = vrot.slane %v1132, 1
    %v1134 = vmax.f32 %v1132, %v1133
    %v1135 = vsel %vm279, %v84, -inf
    %v1136 = vrot.slane %v1135, 4
    %v1137 = vmax.f32 %v1135, %v1136
    %v1138 = vrot.slane %v1137, 2
    %v1139 = vmax.f32 %v1137, %v1138
    %v1140 = vrot.slane %v1139, 1
    %v1141 = vmax.f32 %v1139, %v1140
    %v1142 = vsel %vm301, %v212, -inf
    %v1143 = vrot.slane %v1142, 4
    %v1144 = vmax.f32 %v1142, %v1143
    %v1145 = vrot.slane %v1144, 2
    %v1146 = vmax.f32 %v1144, %v1145
    %v1147 = vrot.slane %v1146, 1
    %v1148 = vmax.f32 %v1146, %v1147
    %v1149 = vsel %vm279, %v85, -inf
    %v1150 = vrot.slane %v1149, 4
    %v1151 = vmax.f32 %v1149, %v1150
    %v1152 = vrot.slane %v1151, 2
    %v1153 = vmax.f32 %v1151, %v1152
    %v1154 = vrot.slane %v1153, 1
    %v1155 = vmax.f32 %v1153, %v1154
    %v1156 = vsel %vm279, %v213, -inf
    %v1157 = vrot.slane %v1156, 4
    %v1158 = vmax.f32 %v1156, %v1157
    %v1159 = vrot.slane %v1158, 2
    %v1160 = vmax.f32 %v1158, %v1159
    %v1161 = vrot.slane %v1160, 1
    %v1162 = vmax.f32 %v1160, %v1161
    %v1163 = vsel %vm279, %v86, -inf
    %v1164 = vrot.slane %v1163, 4
    %v1165 = vmax.f32 %v1163, %v1164
    %v1166 = vrot.slane %v1165, 2
    %v1167 = vmax.f32 %v1165, %v1166
    %v1168 = vrot.slane %v1167, 1
    %v1169 = vmax.f32 %v1167, %v1168
    %v1170 = vsel %vm301, %v214, -inf
    %v1171 = vrot.slane %v1170, 4
    %v1172 = vmax.f32 %v1170, %v1171
    %v1173 = vrot.slane %v1172, 2
    %v1174 = vmax.f32 %v1172, %v1173
    %v1175 = vrot.slane %v1174, 1
    %v1176 = vmax.f32 %v1174, %v1175
    %vm1305 = vcmask 1041409
    %v1306 = vsel %vm1305, %v315, %v286
    %vm1307 = vcmask 1042434
    %v1308 = vsel %vm1307, %v343, %v1306
    %vm1309 = vcmask 1043459
    %v1310 = vsel %vm1309, %v371, %v1308
    %vm1311 = vcmask 1044484
    %v1312 = vsel %vm1311, %v399, %v1310
    %vm1313 = vcmask 1045509
    %v1314 = vsel %vm1313, %v427, %v1312
    %vm1315 = vcmask 1046534
    %v1316 = vsel %vm1315, %v455, %v1314
    %vm1317 = vcmask 1047559
    %v1318 = vsel %vm1317, %v483, %v1316
    %v1319 = vsel %vm1305, %v322, %v293
    %v1320 = vsel %vm1307, %v350, %v1319
    %v1321 = vsel %vm1309, %v378, %v1320
    %v1322 = vsel %vm1311, %v406, %v1321
    %v1323 = vsel %vm1313, %v434, %v1322
    %v1324 = vsel %vm1315, %v462, %v1323
    %v1325 = vsel %vm1317, %v490, %v1324
    %v1326 = vsel %vm1305, %v329, %v300
    %v1327 = vsel %vm1307, %v357, %v1326
    %v1328 = vsel %vm1309, %v385, %v1327
    %v1329 = vsel %vm1311, %v413, %v1328
    %v1330 = vsel %vm1313, %v441, %v1329
    %v1331 = vsel %vm1315, %v469, %v1330
    %v1332 = vsel %vm1317, %v497, %v1331
    %v1333 = vsel %vm1305, %v336, %v308
    %v1334 = vsel %vm1307, %v364, %v1333
    %v1335 = vsel %vm1309, %v392, %v1334
    %v1336 = vsel %vm1311, %v420, %v1335
    %v1337 = vsel %vm1313, %v448, %v1336
    %v1338 = vsel %vm1315, %v476, %v1337
    %v1339 = vsel %vm1317, %v504, %v1338
    %v1340 = vsel %vm1305, %v539, %v511
    %v1341 = vsel %vm1307, %v567, %v1340
    %v1342 = vsel %vm1309, %v595, %v1341
    %v1343 = vsel %vm1311, %v623, %v1342
    %v1344 = vsel %vm1313, %v651, %v1343
    %v1345 = vsel %vm1315, %v679, %v1344
    %v1346 = vsel %vm1317, %v707, %v1345
    %v1347 = vsel %vm1305, %v546, %v518
    %v1348 = vsel %vm1307, %v574, %v1347
    %v1349 = vsel %vm1309, %v602, %v1348
    %v1350 = vsel %vm1311, %v630, %v1349
    %v1351 = vsel %vm1313, %v658, %v1350
    %v1352 = vsel %vm1315, %v686, %v1351
    %v1353 = vsel %vm1317, %v714, %v1352
    %v1354 = vsel %vm1305, %v553, %v525
    %v1355 = vsel %vm1307, %v581, %v1354
    %v1356 = vsel %vm1309, %v609, %v1355
    %v1357 = vsel %vm1311, %v637, %v1356
    %v1358 = vsel %vm1313, %v665, %v1357
    %v1359 = vsel %vm1315, %v693, %v1358
    %v1360 = vsel %vm1317, %v721, %v1359
    %v1361 = vsel %vm1305, %v560, %v532
    %v1362 = vsel %vm1307, %v588, %v1361
    %v1363 = vsel %vm1309, %v616, %v1362
    %v1364 = vsel %vm1311, %v644, %v1363
    %v1365 = vsel %vm1313, %v672, %v1364
    %v1366 = vsel %vm1315, %v700, %v1365
    %v1367 = vsel %vm1317, %v728, %v1366
    %v1368 = vsel %vm1305, %v763, %v735
    %v1369 = vsel %vm1307, %v791, %v1368
    %v1370 = vsel %vm1309, %v819, %v1369
    %v1371 = vsel %vm1311, %v847, %v1370
    %v1372 = vsel %vm1313, %v875, %v1371
    %v1373 = vsel %vm1315, %v903, %v1372
    %v1374 = vsel %vm1317, %v931, %v1373
    %v1375 = vsel %vm1305, %v770, %v742
    %v1376 = vsel %vm1307, %v798, %v1375
    %v1377 = vsel %vm1309, %v826, %v1376
    %v1378 = vsel %vm1311, %v854, %v1377
    %v1379 = vsel %vm1313, %v882, %v1378
    %v1380 = vsel %vm1315, %v910, %v1379
    %v1381 = vsel %vm1317, %v938, %v1380
    %v1382 = vsel %vm1305, %v777, %v749
    %v1383 = vsel %vm1307, %v805, %v1382
    %v1384 = vsel %vm1309, %v833, %v1383
    %v1385 = vsel %vm1311, %v861, %v1384
    %v1386 = vsel %vm1313, %v889, %v1385
    %v1387 = vsel %vm1315, %v917, %v1386
    %v1388 = vsel %vm1317, %v945, %v1387
    %v1389 = vsel %vm1305, %v784, %v756
    %v1390 = vsel %vm1307, %v812, %v1389
    %v1391 = vsel %vm1309, %v840, %v1390
    %v1392 = vsel %vm1311, %v868, %v1391
    %v1393 = vsel %vm1313, %v896, %v1392
    %v1394 = vsel %vm1315, %v924, %v1393
    %v1395 = vsel %vm1317, %v952, %v1394
    %v1396 = vsel %vm1305, %v987, %v959
    %v1397 = vsel %vm1307, %v1015, %v1396
    %v1398 = vsel %vm1309, %v1043, %v1397
    %v1399 = vsel %vm1311, %v1071, %v1398
    %v1400 = vsel %vm1313, %v1099, %v1399
    %v1401 = vsel %vm1315, %v1127, %v1400
    %v1402 = vsel %vm1317, %v1155, %v1401
    %v1403 = vsel %vm1305, %v994, %v966
    %v1404 = vsel %vm1307, %v1022, %v1403
    %v1405 = vsel %vm1309, %v1050, %v1404
    %v1406 = vsel %vm1311, %v1078, %v1405
    %v1407 = vsel %vm1313, %v1106, %v1406
    %v1408 = vsel %vm1315, %v1134, %v1407
    %v1409 = vsel %vm1317, %v1162, %v1408
    %v1410 = vsel %vm1305, %v1001, %v973
    %v1411 = vsel %vm1307, %v1029, %v1410
    %v1412 = vsel %vm1309, %v1057, %v1411
    %v1413 = vsel %vm1311, %v1085, %v1412
    %v1414 = vsel %vm1313, %v1113, %v1413
    %v1415 = vsel %vm1315, %v1141, %v1414
    %v1416 = vsel %vm1317, %v1169, %v1415
    %v1417 = vsel %vm1305, %v1008, %v980
    %v1418 = vsel %vm1307, %v1036, %v1417
    %v1419 = vsel %vm1309, %v1064, %v1418
    %v1420 = vsel %vm1311, %v1092, %v1419
    %v1421 = vsel %vm1313, %v1120, %v1420
    %v1422 = vsel %vm1315, %v1148, %v1421
    %v1423 = vsel %vm1317, %v1176, %v1422
    %1440 = vst [vmem:[#allocation5] sm:$0xff] %v1318
    %1441 = vst [vmem:[#allocation5 + $0x8] sm:$0xff] %v1325
    %1442 = vst [vmem:[#allocation5 + $0x10] sm:$0xff] %v1332
    %vm1443 = vcmask 64512
    %1444 = vst.msk [vmem:[#allocation5 + $0x18] sm:$0xff] %vm1443, %v1339
    %1445 = vst [vmem:[#allocation5 + $0x20] sm:$0xff] %v1346
    %1446 = vst [vmem:[#allocation5 + $0x28] sm:$0xff] %v1353
    %1447 = vst [vmem:[#allocation5 + $0x30] sm:$0xff] %v1360
    %1448 = vst.msk [vmem:[#allocation5 + $0x38] sm:$0xff] %vm1443, %v1367
    %1449 = vst [vmem:[#allocation5 + $0x40] sm:$0xff] %v1374
    %1450 = vst [vmem:[#allocation5 + $0x48] sm:$0xff] %v1381
    %1451 = vst [vmem:[#allocation5 + $0x50] sm:$0xff] %v1388
    %1452 = vst.msk [vmem:[#allocation5 + $0x58] sm:$0xff] %vm1443, %v1395
    %1453 = vst [vmem:[#allocation5 + $0x60] sm:$0xff] %v1402
    %1454 = vst [vmem:[#allocation5 + $0x68] sm:$0xff] %v1409
    %1455 = vst [vmem:[#allocation5 + $0x70] sm:$0xff] %v1416
    %1456 = vst.msk [vmem:[#allocation5 + $0x78] sm:$0xff] %vm1443, %v1423
    // Predicated region
    $region10: #{tpu_custom_call.1} parent=1 // pred_check
      _
    $region11: #{tpu_custom_call.1} parent=1 // pred_check_branch
      %1458 = sbr.rel (0) target = $region13
    $region12: #{tpu_custom_call.1} parent=1 // pred_region
      %s1460 = ssub.s32 2048, 2048
      %1461 = vsyncadd [#allocation4], %s1460
      %s1462 = sshll.u32 [#allocation5], 4
      %s1463 = int_to_ptr.vmem [resolvable:$true] %s1462
      %1468 = dma.vmem_to_hbm [thread:$0]  %s1463, 2048, %s1, [#allocation4], 512, 512, 32
    $region13: #{tpu_custom_call.1} parent=1 // pred_fallthru
      _
    // Predicated region
    $region14: #{tpu_custom_call.1} parent=1 // pred_check
      _
    $region15: #{tpu_custom_call.1} parent=1 // pred_check_branch
      %1470 = sbr.rel (0) target = $region17
    $region16: #{tpu_custom_call.1} parent=1 // pred_region
      %1471 = dma.done [#allocation4], 2048
    $region17: #{tpu_custom_call.1} parent=1 // pred_fallthru
      _
    %1472 = vsyncpa [#allocation3], 1
    %1473 = vsyncpa [#allocation4], 1

</llo_original>
